<compile_context>
chip_gen: v7x
topology: tpu7x:2x2x1
jax: 0.10.0
libtpu: 0.0.40
codegen_flags: <defaults>
</compile_context>

<pallas_src>
import functools
import math

import jax
import jax.numpy as jnp
from jax.experimental import pallas as pl
from jax.experimental.pallas import tpu as pltpu


# ----------------------------- kernels --------------------------------------


def _posenc_add_kernel(x_ref, pe_ref, o_ref):
    # x_ref: (TS, B, E); pe_ref: (TS, E) -> broadcast once over the batch axis.
    pe = pe_ref[...][:, None, :]
    o_ref[...] = (x_ref[...] + pe).astype(o_ref.dtype)


def _posenc_add_dropout_kernel(x_ref, pe_ref, bits_ref, o_ref, *, threshold, scale):
    # Inverted dropout (torch.nn.Dropout train-mode semantics) via an integer
    # threshold compare on raw uint32 bits: keep iff bits >= p * 2^32.
    pe = pe_ref[...][:, None, :]
    y = x_ref[...] + pe
    keep = bits_ref[...] >= jnp.uint32(threshold)
    o_ref[...] = jnp.where(keep, y * scale, 0.0).astype(o_ref.dtype)


# ----------------------------- helpers ---------------------------------------


def make_pos_embedding(emb_size: int, maxlen: int = 5000, dtype=jnp.float32):
    """Deterministic sinusoidal buffer, same formula as the PyTorch __init__."""
    den = jnp.exp(
        -jnp.arange(0, emb_size, 2, dtype=jnp.float32) * math.log(10000.0) / emb_size
    )
    pos = jnp.arange(0, maxlen, dtype=jnp.float32).reshape(maxlen, 1)
    pe = jnp.zeros((maxlen, emb_size), dtype=jnp.float32)
    pe = pe.at[:, 0::2].set(jnp.sin(pos * den))
    pe = pe.at[:, 1::2].set(jnp.cos(pos * den))
    return pe[:, None, :].astype(dtype)  # (maxlen, 1, emb_size)


def _pick_block_s(S, B, E, x_itemsize, with_bits,
                  budget_bytes=8 * 1024 * 1024):
    """Largest S-tile whose double-buffered working set fits a conservative
    VMEM budget (safe under v7x's 32 MiB scoped / 64 MiB physical VMEM)."""
    bits_bytes = 4 if with_bits else 0
    per_row = B * E * (2 * x_itemsize + bits_bytes) + E * x_itemsize  # x+out+bits+pe
    per_row *= 2  # double-buffered pipeline stages
    ts = budget_bytes // max(per_row, 1)
    if ts >= S:
        return S
    return max(8, (ts // 8) * 8)  # keep the pe block's sublane dim 8-aligned


# ----------------------------- wrapper ----------------------------------------


def positional_encoding(token_embedding, pos_embedding, *, dropout_p=0.0,
                        training=False, rng_key=None, block_s=None):
    """Equivalent of PositionalEncoding.forward(token_embedding)."""
    S, B, E = token_embedding.shape
    x_dtype = token_embedding.dtype
    # Squeeze the size-1 batch axis: the pe tile stays compact in VMEM and the
    # broadcast happens once per grid step inside the kernel.
    pe = pos_embedding[:S].reshape(S, E).astype(x_dtype)

    use_dropout = bool(training) and dropout_p > 0.0
    itemsize = jnp.dtype(x_dtype).itemsize
    ts = block_s or _pick_block_s(S, B, E, itemsize, use_dropout)
    grid = (pl.cdiv(S, ts),)

    x_spec = pl.BlockSpec((ts, B, E), lambda i: (i, 0, 0))
    pe_spec = pl.BlockSpec((ts, E), lambda i: (i, 0))
    out_spec = pl.BlockSpec((ts, B, E), lambda i: (i, 0, 0))
    out_shape = jax.ShapeDtypeStruct((S, B, E), x_dtype)
    cparams = pltpu.CompilerParams(dimension_semantics=("parallel",))

    if not use_dropout:
        return pl.pallas_call(
            _posenc_add_kernel,
            out_shape=out_shape,
            grid=grid,
            in_specs=[x_spec, pe_spec],
            out_specs=out_spec,
            compiler_params=cparams,
        )(token_embedding, pe)

    if rng_key is None:
        rng_key = jax.random.PRNGKey(0)
    # TODO(synk): dropout mask comes from JAX's counter PRNG (portable to
    # interpret mode and TPU), so it is only statistically equivalent to
    # torch's RNG stream, never bitwise identical.
    bits = jax.random.bits(rng_key, (S, B, E), dtype=jnp.uint32)
    threshold = min(int(round(dropout_p * 4294967296.0)), 4294967295)
    scale = 1.0 / (1.0 - dropout_p)
    kernel = functools.partial(_posenc_add_dropout_kernel,
                               threshold=threshold, scale=scale)
    bits_spec = pl.BlockSpec((ts, B, E), lambda i: (i, 0, 0))
    return pl.pallas_call(
        kernel,
        out_shape=out_shape,
        grid=grid,
        in_specs=[x_spec, pe_spec, bits_spec],
        out_specs=out_spec,
        compiler_params=cparams,
    )(token_embedding, pe, bits)


# ------------------------------- demo -----------------------------------------


if __name__ == "__main__":
    # Small shapes consistent with the module: seq=8, batch=2, emb_size=32.
    # (Production emb_size is typically a multiple of 128, which makes the
    # output stores fully lane-dense; at E=32 the toy case is correctness-only.)
    seq_len, batch, emb_size, maxlen = 8, 2, 32, 64
    dropout_p = 0.1

    key = jax.random.PRNGKey(0)
    k_x, k_drop = jax.random.split(key)
    token_embedding = jax.random.normal(k_x, (seq_len, batch, emb_size),
                                        dtype=jnp.float32)
    pos_embedding = make_pos_embedding(emb_size, maxlen=maxlen)

    # Pure-JAX reference for the eval-mode forward (dropout is identity).
    ref = token_embedding + pos_embedding[:seq_len]

    # Eval-mode forward (module.eval() in PyTorch).
    out = positional_encoding(token_embedding, pos_embedding,
                              dropout_p=dropout_p, training=False)
    out = jax.block_until_ready(out)
    assert out.shape == (seq_len, batch, emb_size)
    assert jnp.allclose(out, ref, atol=1e-6), "eval-mode mismatch vs reference"

    # Train-mode forward: dropout zeroes with prob p and scales survivors.
    out_train = jax.block_until_ready(
        positional_encoding(token_embedding, pos_embedding,
                            dropout_p=dropout_p, training=True, rng_key=k_drop))
    assert out_train.shape == (seq_len, batch, emb_size)
    scale = 1.0 / (1.0 - dropout_p)
    dropped = out_train == 0.0
    kept_ok = jnp.where(dropped, True,
                        jnp.isclose(out_train, ref * scale, atol=1e-5))
    assert bool(jnp.all(kept_ok)), "train-mode dropout output inconsistent"

    print("KERNEL_OK")
</pallas_src>

<mosaic_0001>
module attributes {stable_mosaic.version = 11 : i64} {
  func.func @_posenc_add_kernel(%arg0: i32, %arg1: memref<8x2x32xf32, #tpu.memory_space<vmem>>, %arg2: memref<8x32xf32, #tpu.memory_space<vmem>>, %arg3: memref<8x2x32xf32, #tpu.memory_space<vmem>>) attributes {dimension_semantics = [#tpu.dimension_semantics<parallel>], iteration_bounds = array<i64: 1>, scalar_prefetch = 0 : i64, scratch_operands = 0 : i64, tpu.core_type = #tpu.core_type<tc>, window_params = [{transform_indices = @transform_0, window_bounds = array<i64: 8, 2, 32>}, {transform_indices = @transform_1, window_bounds = array<i64: 8, 32>}, {transform_indices = @transform_2, window_bounds = array<i64: 8, 2, 32>}]} {
    %c0 = arith.constant 0 : index
    %c0_0 = arith.constant 0 : index
    %0 = vector.load %arg2[%c0, %c0_0] : memref<8x32xf32, #tpu.memory_space<vmem>>, vector<8x32xf32>
    %1 = vector.shape_cast %0 : vector<8x32xf32> to vector<8x1x32xf32>
    %c0_1 = arith.constant 0 : index
    %c0_2 = arith.constant 0 : index
    %c0_3 = arith.constant 0 : index
    %2 = vector.load %arg1[%c0_1, %c0_2, %c0_3] : memref<8x2x32xf32, #tpu.memory_space<vmem>>, vector<8x2x32xf32>
    %3 = vector.broadcast %1 : vector<8x1x32xf32> to vector<8x2x32xf32>
    %4 = arith.addf %2, %3 : vector<8x2x32xf32>
    %c0_4 = arith.constant 0 : index
    %c0_5 = arith.constant 0 : index
    %c0_6 = arith.constant 0 : index
    %5 = vector.load %arg3[%c0_4, %c0_5, %c0_6] : memref<8x2x32xf32, #tpu.memory_space<vmem>>, vector<8x2x32xf32>
    tpu.vector_store %arg3[%c0_4, %c0_5, %c0_6], %4 {strides = array<i32>} : memref<8x2x32xf32, #tpu.memory_space<vmem>>, vector<8x2x32xf32>,
    return
  }
  func.func @transform_0(%arg0: i32) -> (i32, i32, i32) {
    %c0_i32 = arith.constant 0 : i32
    %c0_i32_0 = arith.constant 0 : i32
    %c0_i32_1 = arith.constant 0 : i32
    return %arg0, %c0_i32, %c0_i32_0 : i32, i32, i32
  }
  func.func @transform_1(%arg0: i32) -> (i32, i32) {
    %c0_i32 = arith.constant 0 : i32
    %c0_i32_0 = arith.constant 0 : i32
    return %arg0, %c0_i32 : i32, i32
  }
  func.func @transform_2(%arg0: i32) -> (i32, i32, i32) {
    %c0_i32 = arith.constant 0 : i32
    %c0_i32_0 = arith.constant 0 : i32
    %c0_i32_1 = arith.constant 0 : i32
    return %arg0, %c0_i32, %c0_i32_0 : i32, i32, i32
  }
}

</mosaic_0001>

<llo_original>
// kernel: tpu_custom_call.1
$region0: #{tpu_custom_call.1}
  #allocation0 [shape = 'u32[]', space=smem, size = 0x4, offset = 0x4, fixed_abs, tag = 'smem constant byte address 0x4 - core index']
  #allocation1 [shape = 'u32[144,128]{1,0:T(1,128)}', space=vmem, size = 0x12000, scoped, tag = 'internal scratch']
  %s0 = inlined_call_operand.hbm [shape: f32[8,2,32], index: 0, kind: input, shape index: {}]
  %s1 = inlined_call_operand.hbm [shape: f32[8,32], index: 1, kind: input, shape index: {}]
  %s2 = inlined_call_operand.hbm [shape: f32[8,2,32], index: 2, kind: output, shape index: {}]
  %s3 = sld [smem:[#allocation0]]
  $region26: #{tpu_custom_call.1} parent=0
    _
  %s5 = ssub.s32 1, %s3
  %s6 = scalar_select 0, %s5, %s3
  $region1: #{tpu_custom_call.1} parent=0
    #allocation2 [shape = 'u8[8192]{0}', space=vmem, size = 0x2000, scoped, tag = 'input window, operand 0, single buffered']
    #allocation3 [shape = 's32[1]{0}', space=sflag, size = 0x4, scoped, tag = 'scoped memory for tpu_custom_call.1']
    #allocation4 [shape = 's32[1]{0}', space=sflag, size = 0x4, scoped, tag = 'scoped memory for tpu_custom_call.1']
    #allocation5 [shape = 'u8[4096]{0}', space=vmem, size = 0x1000, scoped, tag = 'input window, operand 1, single buffered']
    #allocation6 [shape = 's32[1]{0}', space=sflag, size = 0x4, scoped, tag = 'scoped memory for tpu_custom_call.1']
    #allocation7 [shape = 'u8[8192]{0}', space=vmem, size = 0x2000, scoped, tag = 'output window, operand 0, single buffered']
    %7 = vsyncpa [#allocation3], 0
    %8 = vsyncpa [#allocation6], 0
    %9 = vsyncpa [#allocation4], 0
    // Predicated region
    $region2: #{tpu_custom_call.1} parent=1 // pred_check
      _
    $region3: #{tpu_custom_call.1} parent=1 // pred_check_branch
      %11 = sbr.rel (0) target = $region5
    $region4: #{tpu_custom_call.1} parent=1 // pred_region
      %s13 = ssub.s32 256, 256
      %14 = vsyncadd [#allocation3], %s13
      %s15 = sshll.u32 [#allocation2], 4
      %s16 = int_to_ptr.vmem [resolvable:$true] %s15
      %21 = dma.hbm_to_vmem [thread:$0]  %s0, 256, %s16, [#allocation3], 32, 32, 2
    $region5: #{tpu_custom_call.1} parent=1 // pred_fallthru
      _
    // Predicated region
    $region6: #{tpu_custom_call.1} parent=1 // pred_check
      _
    $region7: #{tpu_custom_call.1} parent=1 // pred_check_branch
      %23 = sbr.rel (0) target = $region9
    $region8: #{tpu_custom_call.1} parent=1 // pred_region
      %s25 = ssub.s32 128, 128
      %26 = vsyncadd [#allocation6], %s25
      %s28 = sshll.u32 [#allocation5], 4
      %s29 = int_to_ptr.vmem [resolvable:$true] %s28
      %31 = dma.hbm_to_vmem [thread:$0]  %s1, 128, %s29, [#allocation6]
    $region9: #{tpu_custom_call.1} parent=1 // pred_fallthru
      _
    // Predicated region
    $region10: #{tpu_custom_call.1} parent=1 // pred_check
      _
    $region11: #{tpu_custom_call.1} parent=1 // pred_check_branch
      %33 = sbr.rel (0) target = $region13
    $region12: #{tpu_custom_call.1} parent=1 // pred_region
      %34 = dma.done [#allocation3], 256
    $region13: #{tpu_custom_call.1} parent=1 // pred_fallthru
      _
    // Predicated region
    $region14: #{tpu_custom_call.1} parent=1 // pred_check
      _
    $region15: #{tpu_custom_call.1} parent=1 // pred_check_branch
      %36 = sbr.rel (0) target = $region17
    $region16: #{tpu_custom_call.1} parent=1 // pred_region
      %37 = dma.done [#allocation6], 128
    $region17: #{tpu_custom_call.1} parent=1 // pred_fallthru
      _
    %v38 = vld [vmem:[#allocation5] sm:$0xff]
    %v40 = vcombine.high %v38, %v38
    %v42 = vunpack.c.l.s4 1966171168
    %v43 = vunpack.c.0.s8 %v42
    %v44 = vlaneseq
    %v45 = vshrl.u32 %v44, 7
    %v46 = vsub.s32 %v43, %v45
    %v47 = vrot.slane %v38, %v46
    %v49 = vunpack.c.l.s4 1966171168
    %v50 = vunpack.c.0.s8 %v49
    %v51 = vlaneseq
    %v52 = vshrl.u32 %v51, 7
    %v53 = vsub.s32 %v50, %v52
    %v54 = vrot.slane %v40, %v53
    %v55 = vcombine.high %v47, %v47
    %v56 = vcombine.high %v54, %v54
    %v58 = vunpack.c.l.s4 1966171168
    %v59 = vunpack.c.0.s8 %v58
    %v60 = vlaneseq
    %v61 = vshrl.u32 %v60, 7
    %v62 = vsub.s32 %v59, %v61
    %v63 = vrot.slane %v47, %v62
    %v65 = vunpack.c.l.s4 1966171168
    %v66 = vunpack.c.0.s8 %v65
    %v67 = vlaneseq
    %v68 = vshrl.u32 %v67, 7
    %v69 = vsub.s32 %v66, %v68
    %v70 = vrot.slane %v54, %v69
    %v72 = vunpack.c.l.s4 1966171168
    %v73 = vunpack.c.0.s8 %v72
    %v74 = vlaneseq
    %v75 = vshrl.u32 %v74, 7
    %v76 = vsub.s32 %v73, %v75
    %v77 = vrot.slane %v55, %v76
    %v79 = vunpack.c.l.s4 1966171168
    %v80 = vunpack.c.0.s8 %v79
    %v81 = vlaneseq
    %v82 = vshrl.u32 %v81, 7
    %v83 = vsub.s32 %v80, %v82
    %v84 = vrot.slane %v56, %v83
    %v85 = vcombine.high %v63, %v63
    %v86 = vcombine.high %v70, %v70
    %v87 = vcombine.high %v77, %v77
    %v88 = vcombine.high %v84, %v84
    %v89 = vld [vmem:[#allocation2] sm:$0x3]
    %v90 = vld [vmem:[#allocation2 + $0x2] sm:$0x3]
    %v91 = vld [vmem:[#allocation2 + $0x4] sm:$0x3]
    %v92 = vld [vmem:[#allocation2 + $0x6] sm:$0x3]
    %v93 = vld [vmem:[#allocation2 + $0x8] sm:$0x3]
    %v94 = vld [vmem:[#allocation2 + $0xa] sm:$0x3]
    %v95 = vld [vmem:[#allocation2 + $0xc] sm:$0x3]
    %v96 = vld [vmem:[#allocation2 + $0xe] sm:$0x3]
    %v97 = vlaneseq
    %v98 = vshrl.u32 %v97, 7
    %v99 = vsub.s32 0, %v98
    %v100 = vrot.slane %v63, %v99
    %v101 = vlaneseq
    %v102 = vshrl.u32 %v101, 7
    %v103 = vsub.s32 0, %v102
    %v104 = vrot.slane %v77, %v103
    %v105 = vlaneseq
    %v106 = vshrl.u32 %v105, 7
    %v107 = vsub.s32 0, %v106
    %v108 = vrot.slane %v85, %v107
    %v109 = vlaneseq
    %v110 = vshrl.u32 %v109, 7
    %v111 = vsub.s32 0, %v110
    %v112 = vrot.slane %v87, %v111
    %v113 = vlaneseq
    %v114 = vshrl.u32 %v113, 7
    %v115 = vsub.s32 0, %v114
    %v116 = vrot.slane %v70, %v115
    %v117 = vlaneseq
    %v118 = vshrl.u32 %v117, 7
    %v119 = vsub.s32 0, %v118
    %v120 = vrot.slane %v84, %v119
    %v121 = vlaneseq
    %v122 = vshrl.u32 %v121, 7
    %v123 = vsub.s32 0, %v122
    %v124 = vrot.slane %v86, %v123
    %v125 = vlaneseq
    %v126 = vshrl.u32 %v125, 7
    %v127 = vsub.s32 0, %v126
    %v128 = vrot.slane %v88, %v127
    %v137 = vadd.f32 %v89, %v100
    %v138 = vadd.f32 %v90, %v104
    %v139 = vadd.f32 %v91, %v108
    %v140 = vadd.f32 %v92, %v112
    %v141 = vadd.f32 %v93, %v116
    %v142 = vadd.f32 %v94, %v120
    %v143 = vadd.f32 %v95, %v124
    %v144 = vadd.f32 %v96, %v128
    %vm145 = vcmask 254976
    %146 = vst.msk [vmem:[#allocation7] sm:$0x3] %vm145, %v137
    %147 = vst.msk [vmem:[#allocation7 + $0x2] sm:$0x3] %vm145, %v138
    %148 = vst.msk [vmem:[#allocation7 + $0x4] sm:$0x3] %vm145, %v139
    %149 = vst.msk [vmem:[#allocation7 + $0x6] sm:$0x3] %vm145, %v140
    %150 = vst.msk [vmem:[#allocation7 + $0x8] sm:$0x3] %vm145, %v141
    %151 = vst.msk [vmem:[#allocation7 + $0xa] sm:$0x3] %vm145, %v142
    %152 = vst.msk [vmem:[#allocation7 + $0xc] sm:$0x3] %vm145, %v143
    %153 = vst.msk [vmem:[#allocation7 + $0xe] sm:$0x3] %vm145, %v144
    // Predicated region
    $region18: #{tpu_custom_call.1} parent=1 // pred_check
      _
    $region19: #{tpu_custom_call.1} parent=1 // pred_check_branch
      %155 = sbr.rel (0) target = $region21
    $region20: #{tpu_custom_call.1} parent=1 // pred_region
      %s157 = ssub.s32 256, 256
      %158 = vsyncadd [#allocation4], %s157
      %s159 = sshll.u32 [#allocation7], 4
      %s160 = int_to_ptr.vmem [resolvable:$true] %s159
      %165 = dma.vmem_to_hbm [thread:$0]  %s160, 256, %s2, [#allocation4], 32, 32, 2
    $region21: #{tpu_custom_call.1} parent=1 // pred_fallthru
      _
    // Predicated region
    $region22: #{tpu_custom_call.1} parent=1 // pred_check
      _
    $region23: #{tpu_custom_call.1} parent=1 // pred_check_branch
      %167 = sbr.rel (0) target = $region25
    $region24: #{tpu_custom_call.1} parent=1 // pred_region
      %168 = dma.done [#allocation4], 256
    $region25: #{tpu_custom_call.1} parent=1 // pred_fallthru
      _
    %169 = vsyncpa [#allocation3], 1
    %170 = vsyncpa [#allocation6], 1
    %171 = vsyncpa [#allocation4], 1

</llo_original>
